<compile_context>
chip_gen: v6e
topology: v6e:2x2x1
jax: 0.10.0
libtpu: 0.0.40
codegen_flags: <defaults>
</compile_context>

<pallas_src>
import functools

import numpy as np
import jax
import jax.numpy as jnp
from jax import lax
from jax.experimental import pallas as pl
from jax.experimental.pallas import tpu as pltpu


def generate_kernel_offsets(curve_width, tgt_shape):
    """Replicates PointRecoveryLoss.generate_kernel (returns (K, 2) offsets)."""
    width = np.arange(curve_width)
    g0, g1 = np.meshgrid(width, width, indexing="ij")       # torch.meshgrid default
    k = np.stack([g0, g1], axis=-1).astype(np.float32)      # (cw, cw, 2)
    k = k - (curve_width // 2)
    k[..., 0] = k[..., 0] / tgt_shape[1]                     # x offsets scaled by W
    k[..., 1] = k[..., 1] / tgt_shape[0]                     # y offsets scaled by H
    return jnp.asarray(k.reshape(-1, 2))                     # (K, 2)


def _round_up(x, m):
    return ((x + m - 1) // m) * m


def _choose_block_batch(B, H_pad, W_pad, P, budget_bytes=8 << 20):
    """Largest divisor of B whose double-buffered input tiles fit `budget_bytes`
    while keeping >= 2 grid steps when B >= 2 (so both v7x TensorCores get work)."""
    p_rows = _round_up(P, 8)
    per_b = 2 * (H_pad * W_pad * 2) + 2 * (p_rows * 128 * 4)   # bf16 mask + f32 points
    best = 1
    for bb in range(1, B + 1):
        if B % bb != 0:
            continue
        if bb * per_b > budget_bytes:
            continue
        if B >= 2 and B // bb < 2:
            continue
        best = bb
    return best


def _recovery_loss_kernel(pts_ref, mask_ref, out_ref, *,
                          ce_weight, dice_weight, H, W, H_pad, W_pad, P, Bb):
    # Statically unrolled over the Bb batches handled by this grid step.
    for b in range(Bb):
        pts = pts_ref[b]                       # (P, 2) f32, lane 0 = x, lane 1 = y
        mask = mask_ref[b]                     # (H_pad, W_pad) bf16 (exact 0/1 values)
        px = pts[:, 0:1]                       # (P, 1) normalized x in [0, 1]
        py = pts[:, 1:2]                       # (P, 1) normalized y in [0, 1]

        # grid_sample unnormalization (align_corners=False): grid = 2*p - 1.
        ix = px * float(W) - 0.5
        iy = py * float(H) - 0.5
        x0 = jnp.floor(ix)
        y0 = jnp.floor(iy)
        wx1 = ix - x0
        wx0 = 1.0 - wx1
        wy1 = iy - y0
        wy0 = 1.0 - wy1
        x0i = x0.astype(jnp.int32)
        y0i = y0.astype(jnp.int32)

        # One iota + one subtraction per axis.  Out-of-range corner indices
        # (x in {-1, W}, y in {-1, H}) either miss the iota range or hit zero-padded
        # mask rows/cols -> exactly padding_mode='zeros'.
        dx = lax.broadcasted_iota(jnp.int32, (P, W_pad), 1) - x0i     # (P, W_pad)
        dy = lax.broadcasted_iota(jnp.int32, (P, H_pad), 1) - y0i     # (P, H_pad)

        # x bilinear weights stay f32 on the VPU (nested where, no extra add).
        Wx = jnp.where(dx == 0, wx0, jnp.where(dx == 1, wx1, 0.0))    # (P, W_pad) f32

        # y gather: two exact 0/1 bf16 one-hots on the MXU (f32 accumulate); the f32
        # bilinear weights are applied afterwards, so dt has no bf16 rounding.
        oh_y0 = (dy == 0).astype(jnp.bfloat16)                        # (P, H_pad)
        oh_y1 = (dy == 1).astype(jnp.bfloat16)
        row0 = jnp.dot(oh_y0, mask, preferred_element_type=jnp.float32)   # (P, W_pad)
        row1 = jnp.dot(oh_y1, mask, preferred_element_type=jnp.float32)   # (P, W_pad)
        tmp = wy0 * row0 + wy1 * row1                                 # (P, W_pad) f32

        dt = jnp.sum(tmp * Wx, axis=-1, keepdims=True)                # (P, 1)
        dt = jnp.maximum(dt, 0.0)                                     # guard, dt >= 0

        loss = jnp.zeros((1, 1), jnp.float32)
        if ce_weight > 0:
            # F.binary_cross_entropy(dt, ones): per-element min(-log(dt), 100), mean.
            bce = jnp.minimum(-jnp.log(dt), 100.0)
            loss = loss + ce_weight * (jnp.sum(bce, keepdims=True) / float(P))
        if dice_weight > 0:
            s = jnp.sum(dt, keepdims=True)
            loss = loss + dice_weight * (1.0 - (2.0 * s + 1.0) / (s + float(P) + 1.0))
        out_ref[b] = loss


def point_recovery_loss(points, gt_masks, *, ce_weight, dice_weight,
                        curve_width, tgt_shape):
    B, N, _ = points.shape
    _, H, Wd = gt_masks.shape
    offsets = generate_kernel_offsets(curve_width, tgt_shape)         # (K, 2)
    K = offsets.shape[0]
    P = N * K

    # points.unsqueeze(2) - kernel, flatten(1,2), clamp to [0, 1]  (cheap glue).
    # Kept as ONE contiguous (B, P, 2) array -> a single points DMA per grid step.
    pe = points[:, :, None, :] - offsets[None, None, :, :]            # (B, N, K, 2)
    pe = jnp.clip(pe.reshape(B, P, 2), 0.0, 1.0).astype(jnp.float32)

    # Lane/sublane-dense zero-padded mask; bf16 is exact for binary masks and halves
    # the mask DMA bytes.  (A non-binary GT heatmap would need the f32 mask path.)
    H_pad = _round_up(H, 16)
    W_pad = _round_up(Wd, 128)
    gt = gt_masks.astype(jnp.bfloat16)
    if (H_pad, W_pad) != (H, Wd):
        gt = jnp.pad(gt, ((0, 0), (0, H_pad - H), (0, W_pad - Wd)))

    Bb = _choose_block_batch(B, H_pad, W_pad, P)
    grid = (B // Bb,)

    kern = functools.partial(_recovery_loss_kernel,
                             ce_weight=float(ce_weight),
                             dice_weight=float(dice_weight),
                             H=H, W=Wd, H_pad=H_pad, W_pad=W_pad, P=P, Bb=Bb)

    cost = pl.CostEstimate(
        flops=int(2 * 2 * B * P * H_pad * W_pad + 12 * B * P * (H_pad + W_pad)),
        transcendentals=int(B * P),
        bytes_accessed=int(B * (H_pad * W_pad * 2 + P * 2 * 4 + 4)),
    )

    out = pl.pallas_call(
        kern,
        out_shape=jax.ShapeDtypeStruct((B, 1, 1), jnp.float32),
        grid_spec=pltpu.PrefetchScalarGridSpec(
            num_scalar_prefetch=0,
            grid=grid,
            in_specs=[
                pl.BlockSpec((Bb, P, 2), lambda g: (g, 0, 0)),
                pl.BlockSpec((Bb, H_pad, W_pad), lambda g: (g, 0, 0)),
            ],
            out_specs=pl.BlockSpec((Bb, 1, 1), lambda g: (g, 0, 0)),
        ),
        compiler_params=pltpu.CompilerParams(
            dimension_semantics=("parallel",),
            vmem_limit_bytes=32 * 1024 * 1024,
        ),
        cost_estimate=cost,
    )(pe, gt)
    return out[:, 0, 0]                                               # (B,)


def _reference(points, gt_masks, *, ce_weight, dice_weight, curve_width, tgt_shape):
    """Pure-JAX reference of the PyTorch forward (bilinear grid_sample, zeros pad)."""
    B, N, _ = points.shape
    _, H, Wd = gt_masks.shape
    offsets = generate_kernel_offsets(curve_width, tgt_shape)
    K = offsets.shape[0]
    P = N * K
    pe = jnp.clip((points[:, :, None, :] - offsets[None, None, :, :]).reshape(B, P, 2),
                  0.0, 1.0)
    ix = pe[..., 0] * Wd - 0.5
    iy = pe[..., 1] * H - 0.5
    x0 = jnp.floor(ix)
    y0 = jnp.floor(iy)
    wx1, wy1 = ix - x0, iy - y0
    wx0, wy0 = 1.0 - wx1, 1.0 - wy1
    gt = gt_masks.astype(jnp.float32)

    def sample(xi, yi):
        xi_i = xi.astype(jnp.int32)
        yi_i = yi.astype(jnp.int32)
        valid = (xi_i >= 0) & (xi_i < Wd) & (yi_i >= 0) & (yi_i < H)
        xc = jnp.clip(xi_i, 0, Wd - 1)
        yc = jnp.clip(yi_i, 0, H - 1)
        vals = jnp.take_along_axis(gt.reshape(B, H * Wd), yc * Wd + xc, axis=1)
        return jnp.where(valid, vals, 0.0)

    dt = (wx0 * wy0 * sample(x0, y0) + wx1 * wy0 * sample(x0 + 1, y0)
          + wx0 * wy1 * sample(x0, y0 + 1) + wx1 * wy1 * sample(x0 + 1, y0 + 1))
    loss = jnp.zeros((B,), jnp.float32)
    if ce_weight > 0:
        loss = loss + ce_weight * jnp.mean(jnp.minimum(-jnp.log(dt), 100.0), axis=1)
    if dice_weight > 0:
        s = dt.sum(-1)
        loss = loss + dice_weight * (1.0 - (2.0 * s + 1.0) / (s + P + 1.0))
    return loss


def _run_case(key, B, N, curve_width, H, W, ce_weight, dice_weight):
    tgt_shape = (H, W)
    kp, km = jax.random.split(key)
    points = jax.random.uniform(kp, (B, N, 2), jnp.float32)           # normalized (x, y)
    gt_masks = (jax.random.uniform(km, (B, H, W)) > 0.5).astype(jnp.float32)

    loss = point_recovery_loss(points, gt_masks,
                               ce_weight=ce_weight, dice_weight=dice_weight,
                               curve_width=curve_width, tgt_shape=tgt_shape)
    jax.block_until_ready(loss)

    ref = _reference(points, gt_masks,
                     ce_weight=ce_weight, dice_weight=dice_weight,
                     curve_width=curve_width, tgt_shape=tgt_shape)
    np.testing.assert_allclose(np.asarray(loss), np.asarray(ref), rtol=1e-3, atol=1e-3)


if __name__ == "__main__":
    key = jax.random.PRNGKey(0)
    k1, k2 = jax.random.split(key)

    # Case 1: canonical small shapes (W padded 16 -> 128 inside the wrapper).
    _run_case(k1, B=2, N=8, curve_width=3, H=16, W=16, ce_weight=1.0, dice_weight=1.0)
    # Case 2: non-aligned H/W/P and multi-batch-per-step path (B=4 -> Bb=2, grid=2).
    _run_case(k2, B=4, N=10, curve_width=3, H=24, W=40, ce_weight=1.0, dice_weight=1.0)

    print("KERNEL_OK")
</pallas_src>

<mosaic_0001>
module attributes {stable_mosaic.version = 11 : i64} {
  func.func @_recovery_loss_kernel(%arg0: i32, %arg1: memref<1x72x2xf32, #tpu.memory_space<vmem>>, %arg2: memref<1x16x128xbf16, #tpu.memory_space<vmem>>, %arg3: memref<1x1x1xf32, #tpu.memory_space<vmem>>) attributes {dimension_semantics = [#tpu.dimension_semantics<parallel>], iteration_bounds = array<i64: 2>, scalar_prefetch = 0 : i64, scratch_operands = 0 : i64, tpu.core_type = #tpu.core_type<tc>, window_params = [{transform_indices = @transform_0, window_bounds = array<i64: 1, 72, 2>}, {transform_indices = @transform_1, window_bounds = array<i64: 1, 16, 128>}, {transform_indices = @transform_2, window_bounds = array<i64: 1, 1, 1>}]} {
    %c0 = arith.constant 0 : index
    %c0_0 = arith.constant 0 : index
    %c0_1 = arith.constant 0 : index
    %0 = vector.load %arg1[%c0, %c0_0, %c0_1] : memref<1x72x2xf32, #tpu.memory_space<vmem>>, vector<1x72x2xf32>
    %1 = vector.shape_cast %0 : vector<1x72x2xf32> to vector<72x2xf32>
    %c0_2 = arith.constant 0 : index
    %c0_3 = arith.constant 0 : index
    %c0_4 = arith.constant 0 : index
    %2 = vector.load %arg2[%c0_2, %c0_3, %c0_4] : memref<1x16x128xbf16, #tpu.memory_space<vmem>>, vector<1x16x128xbf16>
    %3 = vector.shape_cast %2 : vector<1x16x128xbf16> to vector<16x128xbf16>
    %4 = vector.extract_strided_slice %1 {offsets = [0, 0], sizes = [72, 1], strides = [1, 1]} : vector<72x2xf32> to vector<72x1xf32>
    %5 = vector.extract_strided_slice %1 {offsets = [0, 1], sizes = [72, 1], strides = [1, 1]} : vector<72x2xf32> to vector<72x1xf32>
    %cst = arith.constant 1.600000e+01 : f32
    %6 = vector.broadcast %cst : f32 to vector<72x1xf32>
    %7 = arith.mulf %4, %6 : vector<72x1xf32>
    %cst_5 = arith.constant 5.000000e-01 : f32
    %8 = vector.broadcast %cst_5 : f32 to vector<72x1xf32>
    %9 = arith.subf %7, %8 : vector<72x1xf32>
    %cst_6 = arith.constant 1.600000e+01 : f32
    %10 = vector.broadcast %cst_6 : f32 to vector<72x1xf32>
    %11 = arith.mulf %5, %10 : vector<72x1xf32>
    %cst_7 = arith.constant 5.000000e-01 : f32
    %12 = vector.broadcast %cst_7 : f32 to vector<72x1xf32>
    %13 = arith.subf %11, %12 : vector<72x1xf32>
    %14 = math.floor %9 : vector<72x1xf32>
    %15 = math.floor %13 : vector<72x1xf32>
    %16 = arith.subf %9, %14 : vector<72x1xf32>
    %cst_8 = arith.constant 1.000000e+00 : f32
    %17 = vector.broadcast %cst_8 : f32 to vector<72x1xf32>
    %18 = arith.subf %17, %16 : vector<72x1xf32>
    %19 = arith.subf %13, %15 : vector<72x1xf32>
    %cst_9 = arith.constant 1.000000e+00 : f32
    %20 = vector.broadcast %cst_9 : f32 to vector<72x1xf32>
    %21 = arith.subf %20, %19 : vector<72x1xf32>
    %22 = arith.fptosi %14 : vector<72x1xf32> to vector<72x1xi32>
    %23 = arith.fptosi %15 : vector<72x1xf32> to vector<72x1xi32>
    %24 = tpu.iota {dimensions = array<i32: 1>} : vector<72x128xi32>
    %25 = vector.broadcast %22 : vector<72x1xi32> to vector<72x128xi32>
    %26 = arith.subi %24, %25 : vector<72x128xi32>
    %27 = tpu.iota {dimensions = array<i32: 1>} : vector<72x16xi32>
    %28 = vector.broadcast %23 : vector<72x1xi32> to vector<72x16xi32>
    %29 = arith.subi %27, %28 : vector<72x16xi32>
    %c0_i32 = arith.constant 0 : i32
    %30 = vector.broadcast %c0_i32 : i32 to vector<72x128xi32>
    %31 = arith.cmpi eq, %26, %30 : vector<72x128xi32>
    %c1_i32 = arith.constant 1 : i32
    %32 = vector.broadcast %c1_i32 : i32 to vector<72x128xi32>
    %33 = arith.cmpi eq, %26, %32 : vector<72x128xi32>
    %cst_10 = arith.constant 0.000000e+00 : f32
    %34 = vector.shape_cast %16 : vector<72x1xf32> to vector<72x1xf32>
    %35 = vector.broadcast %34 : vector<72x1xf32> to vector<72x128xf32>
    %36 = vector.broadcast %cst_10 : f32 to vector<72x128xf32>
    %37 = arith.select %33, %35, %36 : vector<72x128xi1>, vector<72x128xf32>
    %38 = vector.shape_cast %18 : vector<72x1xf32> to vector<72x1xf32>
    %39 = vector.broadcast %38 : vector<72x1xf32> to vector<72x128xf32>
    %40 = arith.select %31, %39, %37 : vector<72x128xi1>, vector<72x128xf32>
    %c0_i32_11 = arith.constant 0 : i32
    %41 = vector.broadcast %c0_i32_11 : i32 to vector<72x16xi32>
    %42 = arith.cmpi eq, %29, %41 : vector<72x16xi32>
    %43 = arith.extui %42 : vector<72x16xi1> to vector<72x16xi32>
    %44 = arith.sitofp %43 : vector<72x16xi32> to vector<72x16xf32>
    %45 = arith.truncf %44 : vector<72x16xf32> to vector<72x16xbf16>
    %c1_i32_12 = arith.constant 1 : i32
    %46 = vector.broadcast %c1_i32_12 : i32 to vector<72x16xi32>
    %47 = arith.cmpi eq, %29, %46 : vector<72x16xi32>
    %48 = arith.extui %47 : vector<72x16xi1> to vector<72x16xi32>
    %49 = arith.sitofp %48 : vector<72x16xi32> to vector<72x16xf32>
    %50 = arith.truncf %49 : vector<72x16xf32> to vector<72x16xbf16>
    %cst_13 = arith.constant dense<0.000000e+00> : vector<72x128xf32>
    %51 = tpu.matmul %45, %3, %cst_13 {dimension_numbers = #tpu.dot_dimension_numbers<[1], [0], [0], [1], [0, 0, 1, 1], [], []>} : vector<72x16xbf16>, vector<16x128xbf16>, vector<72x128xf32> -> vector<72x128xf32>
    %cst_14 = arith.constant dense<0.000000e+00> : vector<72x128xf32>
    %52 = tpu.matmul %50, %3, %cst_14 {dimension_numbers = #tpu.dot_dimension_numbers<[1], [0], [0], [1], [0, 0, 1, 1], [], []>} : vector<72x16xbf16>, vector<16x128xbf16>, vector<72x128xf32> -> vector<72x128xf32>
    %53 = vector.broadcast %21 : vector<72x1xf32> to vector<72x128xf32>
    %54 = arith.mulf %53, %51 : vector<72x128xf32>
    %55 = vector.broadcast %19 : vector<72x1xf32> to vector<72x128xf32>
    %56 = arith.mulf %55, %52 : vector<72x128xf32>
    %57 = arith.addf %54, %56 : vector<72x128xf32>
    %58 = arith.mulf %57, %40 : vector<72x128xf32>
    %cst_15 = arith.constant dense<0.000000e+00> : vector<72xf32>
    %59 = vector.multi_reduction <add>, %58, %cst_15 [1] : vector<72x128xf32> to vector<72xf32>
    %60 = vector.shape_cast %59 : vector<72xf32> to vector<72x1xf32>
    %cst_16 = arith.constant 0.000000e+00 : f32
    %61 = vector.broadcast %cst_16 : f32 to vector<72x1xf32>
    %62 = arith.maximumf %60, %61 : vector<72x1xf32>
    %cst_17 = arith.constant 0.000000e+00 : f32
    %63 = vector.broadcast %cst_17 : f32 to vector<1x1xf32>
    %64 = math.log %62 : vector<72x1xf32>
    %cst_18 = arith.constant 0.000000e+00 : f32
    %65 = vector.broadcast %cst_18 : f32 to vector<72x1xf32>
    %66 = arith.subf %65, %64 : vector<72x1xf32>
    %cst_19 = arith.constant 1.000000e+02 : f32
    %67 = vector.broadcast %cst_19 : f32 to vector<72x1xf32>
    %68 = arith.minimumf %66, %67 : vector<72x1xf32>
    %69 = vector.shape_cast %68 : vector<72x1xf32> to vector<1x72x1xf32>
    %cst_20 = arith.constant dense<0.000000e+00> : vector<1xf32>
    %70 = vector.multi_reduction <add>, %69, %cst_20 [1, 2] : vector<1x72x1xf32> to vector<1xf32>
    %71 = vector.shape_cast %70 : vector<1xf32> to vector<1x1x1xf32>
    %72 = vector.extract %71[0, 0, 0] : f32 from vector<1x1x1xf32>
    %73 = vector.broadcast %72 : f32 to vector<1x1xf32>
    %cst_21 = arith.constant 7.200000e+01 : f32
    %74 = vector.broadcast %cst_21 : f32 to vector<1x1xf32>
    %75 = arith.divf %73, %74 : vector<1x1xf32>
    %cst_22 = arith.constant 1.000000e+00 : f32
    %76 = vector.broadcast %cst_22 : f32 to vector<1x1xf32>
    %77 = arith.mulf %76, %75 : vector<1x1xf32>
    %78 = arith.addf %63, %77 : vector<1x1xf32>
    %79 = vector.shape_cast %62 : vector<72x1xf32> to vector<1x72x1xf32>
    %cst_23 = arith.constant dense<0.000000e+00> : vector<1xf32>
    %80 = vector.multi_reduction <add>, %79, %cst_23 [1, 2] : vector<1x72x1xf32> to vector<1xf32>
    %81 = vector.shape_cast %80 : vector<1xf32> to vector<1x1x1xf32>
    %82 = vector.extract %81[0, 0, 0] : f32 from vector<1x1x1xf32>
    %83 = vector.broadcast %82 : f32 to vector<1x1xf32>
    %cst_24 = arith.constant 2.000000e+00 : f32
    %84 = vector.broadcast %cst_24 : f32 to vector<1x1xf32>
    %85 = arith.mulf %84, %83 : vector<1x1xf32>
    %cst_25 = arith.constant 1.000000e+00 : f32
    %86 = vector.broadcast %cst_25 : f32 to vector<1x1xf32>
    %87 = arith.addf %85, %86 : vector<1x1xf32>
    %cst_26 = arith.constant 7.200000e+01 : f32
    %88 = vector.broadcast %cst_26 : f32 to vector<1x1xf32>
    %89 = arith.addf %83, %88 : vector<1x1xf32>
    %cst_27 = arith.constant 1.000000e+00 : f32
    %90 = vector.broadcast %cst_27 : f32 to vector<1x1xf32>
    %91 = arith.addf %89, %90 : vector<1x1xf32>
    %92 = arith.divf %87, %91 : vector<1x1xf32>
    %cst_28 = arith.constant 1.000000e+00 : f32
    %93 = vector.broadcast %cst_28 : f32 to vector<1x1xf32>
    %94 = arith.subf %93, %92 : vector<1x1xf32>
    %cst_29 = arith.constant 1.000000e+00 : f32
    %95 = vector.broadcast %cst_29 : f32 to vector<1x1xf32>
    %96 = arith.mulf %95, %94 : vector<1x1xf32>
    %97 = arith.addf %78, %96 : vector<1x1xf32>
    %c0_30 = arith.constant 0 : index
    %c0_31 = arith.constant 0 : index
    %c0_32 = arith.constant 0 : index
    %98 = vector.load %arg3[%c0_30, %c0_31, %c0_32] : memref<1x1x1xf32, #tpu.memory_space<vmem>>, vector<1x1x1xf32>
    %99 = vector.shape_cast %98 : vector<1x1x1xf32> to vector<1x1xf32>
    %100 = vector.shape_cast %97 : vector<1x1xf32> to vector<1x1x1xf32>
    tpu.vector_store %arg3[%c0_30, %c0_31, %c0_32], %100 {strides = array<i32>} : memref<1x1x1xf32, #tpu.memory_space<vmem>>, vector<1x1x1xf32>,
    return
  }
  func.func @transform_0(%arg0: i32) -> (i32, i32, i32) {
    %c0_i32 = arith.constant 0 : i32
    %c0_i32_0 = arith.constant 0 : i32
    %c0_i32_1 = arith.constant 0 : i32
    return %arg0, %c0_i32, %c0_i32_0 : i32, i32, i32
  }
  func.func @transform_1(%arg0: i32) -> (i32, i32, i32) {
    %c0_i32 = arith.constant 0 : i32
    %c0_i32_0 = arith.constant 0 : i32
    %c0_i32_1 = arith.constant 0 : i32
    return %arg0, %c0_i32, %c0_i32_0 : i32, i32, i32
  }
  func.func @transform_2(%arg0: i32) -> (i32, i32, i32) {
    %c0_i32 = arith.constant 0 : i32
    %c0_i32_0 = arith.constant 0 : i32
    %c0_i32_1 = arith.constant 0 : i32
    return %arg0, %c0_i32, %c0_i32_0 : i32, i32, i32
  }
}

</mosaic_0001>

<llo_original>
// kernel: tpu_custom_call.1
$region0: #{tpu_custom_call.1}
  #allocation0 [shape = 'u32[]', space=smem, size = 0x4, offset = 0x4, fixed_abs, tag = 'smem constant byte address 0x4 - core index']
  #allocation1 [shape = 'u32[144,128]{1,0:T(1,128)}', space=vmem, size = 0x12000, scoped, tag = 'internal scratch']
  %s0 = inlined_call_operand.vmem [shape: f32[2,72,2], index: 0, kind: input, shape index: {}]
  %s1 = inlined_call_operand.vmem [shape: bf16[2,16,128], index: 1, kind: input, shape index: {}]
  %s2 = inlined_call_operand.vmem [shape: f32[2,1,1], index: 2, kind: output, shape index: {}]
  %s3 = sld [smem:[#allocation0]]
  $region41: #{tpu_custom_call.1} parent=0
    _
  %s5 = ssub.s32 1, %s3
  %s6 = scalar_select 0, %s5, %s3
  loop: start=0, step=1, limit=4
  $region2: #{tpu_custom_call.1} parent=0 // loop_pre_header
    _
  $region3: #{tpu_custom_call.1} parent=0 // loop_header
    %s8 = sphi 0, %s12
    %p9 = scmp.ge.s32.totalorder %s8, 4
    %s18 = sphi 0, %s20
    %s21 = sphi 0, %s18
    %s22 = sphi 0, %s21
    %s38 = sphi 0, %s22
    %s44 = sphi 0, %s46
    %s47 = sphi 0, %s44
    %s48 = sphi 0, %s47
    %s64 = sphi 0, %s48
    %s70 = sphi 0, %s72
    %s73 = sphi 0, %s70
    %s74 = sphi 0, %s73
    %s90 = sphi 0, %s74
  $region4: #{tpu_custom_call.1} parent=0 // loop_header_branch
    %11 = sbr.rel (%p9) target = $region8
  $region5: #{tpu_custom_call.1} parent=0 // loop_body
    %s13 = ssub.s32 %s8, 1
    %s14 = ssub.s32 %s8, 2
    %s15 = sadd.s32 %s8, 1
    %s16 = ssub.s32 %s8, %s15
    %p17 = scmp.eq.s32.totalorder %s16, 0
    %s19 = sadd.s32 %s18, 1
    %s20 = scalar_select %p17, %s18, %s19
    %p23 = pneg %p17
    %p24 = scmp.eq.s32.totalorder %s8, 1
    %p25 = por %p23, %p24
    %p26 = scmp.ne.s32.totalorder %s18, %s21
    %p27 = scmp.eq.s32.totalorder %s8, 0
    %p28 = por %p26, %p27
    %p29 = scmp.ne.s32.totalorder %s18, %s21
    %p30 = scmp.eq.s32.totalorder %s13, 1
    %p31 = por %p29, %p30
    %p32 = scmp.ne.s32.totalorder %s21, %s22
    %p33 = scmp.eq.s32.totalorder %s13, 0
    %p34 = por %p32, %p33
    %p35 = scmp.ne.s32.totalorder %s21, %s22
    %p36 = scmp.eq.s32.totalorder %s14, 1
    %p37 = por %p35, %p36
    %p39 = scmp.ne.s32.totalorder %s22, %s38
    %p40 = scmp.eq.s32.totalorder %s14, 0
    %p41 = por %p39, %p40
    %s42 = ssub.s32 %s8, %s15
    %p43 = scmp.eq.s32.totalorder %s42, 0
    %s45 = sadd.s32 %s44, 1
    %s46 = scalar_select %p43, %s44, %s45
    %p49 = pneg %p43
    %p50 = scmp.eq.s32.totalorder %s8, 1
    %p51 = por %p49, %p50
    %p52 = scmp.ne.s32.totalorder %s44, %s47
    %p53 = scmp.eq.s32.totalorder %s8, 0
    %p54 = por %p52, %p53
    %p55 = scmp.ne.s32.totalorder %s44, %s47
    %p56 = scmp.eq.s32.totalorder %s13, 1
    %p57 = por %p55, %p56
    %p58 = scmp.ne.s32.totalorder %s47, %s48
    %p59 = scmp.eq.s32.totalorder %s13, 0
    %p60 = por %p58, %p59
    %p61 = scmp.ne.s32.totalorder %s47, %s48
    %p62 = scmp.eq.s32.totalorder %s14, 1
    %p63 = por %p61, %p62
    %p65 = scmp.ne.s32.totalorder %s48, %s64
    %p66 = scmp.eq.s32.totalorder %s14, 0
    %p67 = por %p65, %p66
    %s68 = ssub.s32 %s8, %s15
    %p69 = scmp.eq.s32.totalorder %s68, 0
    %s71 = sadd.s32 %s70, 1
    %s72 = scalar_select %p69, %s70, %s71
    %p75 = pneg %p69
    %p76 = scmp.eq.s32.totalorder %s8, 1
    %p77 = por %p75, %p76
    %p78 = scmp.ne.s32.totalorder %s70, %s73
    %p79 = scmp.eq.s32.totalorder %s8, 0
    %p80 = por %p78, %p79
    %p81 = scmp.ne.s32.totalorder %s70, %s73
    %p82 = scmp.eq.s32.totalorder %s13, 1
    %p83 = por %p81, %p82
    %p84 = scmp.ne.s32.totalorder %s73, %s74
    %p85 = scmp.eq.s32.totalorder %s13, 0
    %p86 = por %p84, %p85
    %p87 = scmp.ne.s32.totalorder %s73, %s74
    %p88 = scmp.eq.s32.totalorder %s14, 1
    %p89 = por %p87, %p88
    %p91 = scmp.ne.s32.totalorder %s74, %s90
    %p92 = scmp.eq.s32.totalorder %s14, 0
    %p93 = por %p91, %p92
    %p94 = scmp.le.s32.totalorder 1, %s8
    %p95 = scmp.lt.s32.totalorder %s8, 3
    %p96 = pnand %p94, %p95
    %p97 = pneg %p96
    // Predicated region
    $region9: #{tpu_custom_call.1} parent=5 // pred_check
      _
    $region10: #{tpu_custom_call.1} parent=5 // pred_check_branch
      %99 = sbr.rel (%p96) target = $region12
    $region11: #{tpu_custom_call.1} parent=5 // pred_region
      %s100 = ssub.s32 %s8, 1
    $region12: #{tpu_custom_call.1} parent=5 // pred_fallthru
      _
    %p101 = scmp.lt.s32.totalorder %s8, 2
    // Predicated region
    $region13: #{tpu_custom_call.1} parent=5 // pred_check
      %p102 = pneg %p101
    $region14: #{tpu_custom_call.1} parent=5 // pred_check_branch
      %104 = sbr.rel (%p102) target = $region16
    $region15: #{tpu_custom_call.1} parent=5 // pred_region
      // Predicated region
      $region17: #{tpu_custom_call.1} parent=15 // pred_check
        %p105 = pneg %p28
      $region18: #{tpu_custom_call.1} parent=15 // pred_check_branch
        %107 = sbr.rel (%p105) target = $region20
      $region19: #{tpu_custom_call.1} parent=15 // pred_region
        %p108 = scmp.lt.s32.totalorder %s8, 1
        %s109 = scalar_select %p108, %s8, 1
        %s110 = smul.addr %s109, 9
        %s111 = smul.addr %s110, 8
        %s112 = scalar_lea.vmem %s0, %s111
      $region20: #{tpu_custom_call.1} parent=15 // pred_fallthru
        _
      // Predicated region
      $region21: #{tpu_custom_call.1} parent=15 // pred_check
        %p113 = pneg %p54
      $region22: #{tpu_custom_call.1} parent=15 // pred_check_branch
        %115 = sbr.rel (%p113) target = $region24
      $region23: #{tpu_custom_call.1} parent=15 // pred_region
        %p116 = scmp.lt.s32.totalorder %s8, 1
        %s117 = scalar_select %p116, %s8, 1
        %s118 = smul.addr %s117, 2
        %s119 = smul.addr %s118, 4
        %s120 = scalar_lea.vmem %s1, %s119
      $region24: #{tpu_custom_call.1} parent=15 // pred_fallthru
        _
    $region16: #{tpu_custom_call.1} parent=5 // pred_fallthru
      _
    %p121 = scmp.le.s32.totalorder 1, %s8
    %p122 = scmp.lt.s32.totalorder %s8, 3
    %p123 = pnand %p121, %p122
    %p124 = pneg %p123
    // Predicated region
    $region25: #{tpu_custom_call.1} parent=5 // pred_check
      _
    $region26: #{tpu_custom_call.1} parent=5 // pred_check_branch
      %126 = sbr.rel (%p123) target = $region28
    $region27: #{tpu_custom_call.1} parent=5 // pred_region
      %s127 = ssub.s32 %s8, 1
      %p128 = scmp.lt.s32.totalorder %s13, 1
      %s129 = scalar_select %p128, %s13, 1
      %s130 = smul.addr %s129, 9
      %s131 = smul.addr %s130, 8
      %s132 = scalar_lea.vmem %s0, %s131
      %p133 = pneg %p34
      %p134 = pneg %p31
      %p135 = scmp.lt.s32.totalorder %s13, 1
      %s136 = scalar_select %p135, %s13, 1
      %s137 = smul.addr %s136, 2
      %s138 = smul.addr %s137, 4
      %s139 = scalar_lea.vmem %s1, %s138
      %p140 = pneg %p60
      %p141 = pneg %p57
      %p142 = pneg %p86
      %p143 = pneg %p83
      %p144 = scmp.lt.s32.totalorder %s13, 1
      %s145 = scalar_select %p144, %s13, 1
      %s146 = scalar_lea.vmem %s2, %s145
      %p147 = scmp.lt.s32.totalorder %s13, 1
      %s148 = scalar_select %p147, %s13, 1
      %s149 = smul.addr %s148, 9
      %s150 = smul.addr %s149, 8
      %s151 = scalar_lea.vmem %s0, %s150
      %p152 = scmp.lt.s32.totalorder %s13, 1
      %s153 = scalar_select %p152, %s13, 1
      %s154 = smul.addr %s153, 2
      %s155 = smul.addr %s154, 4
      %s156 = scalar_lea.vmem %s1, %s155
      %p157 = scmp.lt.s32.totalorder %s13, 1
      %s158 = scalar_select %p157, %s13, 1
      %s159 = scalar_lea.vmem %s2, %s158
      %v161 = vld [vmem:[%s151] sm:$0xff]
      %v162 = vld [vmem:[%s151 + $0x8] sm:$0xff]
      %v163 = vld [vmem:[%s151 + $0x10] sm:$0xff]
      %v164 = vld [vmem:[%s151 + $0x18] sm:$0xff]
      %v165 = vld [vmem:[%s151 + $0x20] sm:$0xff]
      %v166 = vld [vmem:[%s151 + $0x28] sm:$0xff]
      %v167 = vld [vmem:[%s151 + $0x30] sm:$0xff]
      %v168 = vld [vmem:[%s151 + $0x38] sm:$0xff]
      %v169 = vld [vmem:[%s151 + $0x40] sm:$0xff]
      %v170 = vld [vmem:[%s156] sm:$0xf]
      %v171 = vld [vmem:[%s156 + $0x4] sm:$0xf]
      %v172 = vmul.f32 %v161, 16.0
      %v173 = vmul.f32 %v162, 16.0
      %v174 = vmul.f32 %v163, 16.0
      %v175 = vmul.f32 %v164, 16.0
      %v176 = vmul.f32 %v165, 16.0
      %v177 = vmul.f32 %v166, 16.0
      %v178 = vmul.f32 %v167, 16.0
      %v179 = vmul.f32 %v168, 16.0
      %v180 = vmul.f32 %v169, 16.0
      %v181 = vsub.f32 %v172, 0.5
      %v182 = vsub.f32 %v173, 0.5
      %v183 = vsub.f32 %v174, 0.5
      %v184 = vsub.f32 %v175, 0.5
      %v185 = vsub.f32 %v176, 0.5
      %v186 = vsub.f32 %v177, 0.5
      %v187 = vsub.f32 %v178, 0.5
      %v188 = vsub.f32 %v179, 0.5
      %v189 = vsub.f32 %v180, 0.5
      %v190 = vfloor.f32 %v181
      %v191 = vfloor.f32 %v182
      %v192 = vfloor.f32 %v183
      %v193 = vfloor.f32 %v184
      %v194 = vfloor.f32 %v185
      %v195 = vfloor.f32 %v186
      %v196 = vfloor.f32 %v187
      %v197 = vfloor.f32 %v188
      %v198 = vfloor.f32 %v189
      %v199 = vsub.f32 %v181, %v190
      %v200 = vsub.f32 %v182, %v191
      %v201 = vsub.f32 %v183, %v192
      %v202 = vsub.f32 %v184, %v193
      %v203 = vsub.f32 %v185, %v194
      %v204 = vsub.f32 %v186, %v195
      %v205 = vsub.f32 %v187, %v196
      %v206 = vsub.f32 %v188, %v197
      %v207 = vsub.f32 %v189, %v198
      %v208 = vsub.f32 1.0, %v199
      %v209 = vsub.f32 1.0, %v200
      %v210 = vsub.f32 1.0, %v201
      %v211 = vsub.f32 1.0, %v202
      %v212 = vsub.f32 1.0, %v203
      %v213 = vsub.f32 1.0, %v204
      %v214 = vsub.f32 1.0, %v205
      %v215 = vsub.f32 1.0, %v206
      %v216 = vsub.f32 1.0, %v207
      %v217 = vcvt.f32.s32.to.zero.pseudo %v190
      %v218 = vcvt.f32.s32.to.zero.pseudo %v191
      %v219 = vcvt.f32.s32.to.zero.pseudo %v192
      %v220 = vcvt.f32.s32.to.zero.pseudo %v193
      %v221 = vcvt.f32.s32.to.zero.pseudo %v194
      %v222 = vcvt.f32.s32.to.zero.pseudo %v195
      %v223 = vcvt.f32.s32.to.zero.pseudo %v196
      %v224 = vcvt.f32.s32.to.zero.pseudo %v197
      %v225 = vcvt.f32.s32.to.zero.pseudo %v198
      %v226 = vlaneseq
      %v227 = vand.u32 %v226, 127
      %228 = vset.pattern.permute.xlu0 0
      %229 = vperm.xlu0 %228, %v217
      %v230 = vpop.permute.xlu0 %229
      %231 = vset.pattern.permute.xlu0 0
      %232 = vperm.xlu0 %231, %v218
      %v233 = vpop.permute.xlu0 %232
      %234 = vset.pattern.permute.xlu0 0
      %235 = vperm.xlu0 %234, %v219
      %v236 = vpop.permute.xlu0 %235
      %237 = vset.pattern.permute.xlu0 0
      %238 = vperm.xlu0 %237, %v220
      %v239 = vpop.permute.xlu0 %238
      %240 = vset.pattern.permute.xlu0 0
      %241 = vperm.xlu0 %240, %v221
      %v242 = vpop.permute.xlu0 %241
      %243 = vset.pattern.permute.xlu0 0
      %244 = vperm.xlu0 %243, %v222
      %v245 = vpop.permute.xlu0 %244
      %246 = vset.pattern.permute.xlu0 0
      %247 = vperm.xlu0 %246, %v223
      %v248 = vpop.permute.xlu0 %247
      %249 = vset.pattern.permute.xlu0 0
      %250 = vperm.xlu0 %249, %v224
      %v251 = vpop.permute.xlu0 %250
      %252 = vset.pattern.permute.xlu0 0
      %253 = vperm.xlu0 %252, %v225
      %v254 = vpop.permute.xlu0 %253
      %v255 = vsub.s32 %v227, %v230
      %v256 = vsub.s32 %v227, %v233
      %v257 = vsub.s32 %v227, %v236
      %v258 = vsub.s32 %v227, %v239
      %v259 = vsub.s32 %v227, %v242
      %v260 = vsub.s32 %v227, %v245
      %v261 = vsub.s32 %v227, %v248
      %v262 = vsub.s32 %v227, %v251
      %v263 = vsub.s32 %v227, %v254
      %264 = vset.pattern.permute.xlu0 1
      %265 = vperm.xlu0 %264, %v217
      %v266 = vpop.permute.xlu0 %265
      %267 = vset.pattern.permute.xlu0 1
      %268 = vperm.xlu0 %267, %v218
      %v269 = vpop.permute.xlu0 %268
      %270 = vset.pattern.permute.xlu0 1
      %271 = vperm.xlu0 %270, %v219
      %v272 = vpop.permute.xlu0 %271
      %273 = vset.pattern.permute.xlu0 1
      %274 = vperm.xlu0 %273, %v220
      %v275 = vpop.permute.xlu0 %274
      %276 = vset.pattern.permute.xlu0 1
      %277 = vperm.xlu0 %276, %v221
      %v278 = vpop.permute.xlu0 %277
      %279 = vset.pattern.permute.xlu0 1
      %280 = vperm.xlu0 %279, %v222
      %v281 = vpop.permute.xlu0 %280
      %282 = vset.pattern.permute.xlu0 1
      %283 = vperm.xlu0 %282, %v223
      %v284 = vpop.permute.xlu0 %283
      %285 = vset.pattern.permute.xlu0 1
      %286 = vperm.xlu0 %285, %v224
      %v287 = vpop.permute.xlu0 %286
      %288 = vset.pattern.permute.xlu0 1
      %289 = vperm.xlu0 %288, %v225
      %v290 = vpop.permute.xlu0 %289
      %v291 = vsub.s32 %v227, %v266
      %v292 = vsub.s32 %v227, %v269
      %v293 = vsub.s32 %v227, %v272
      %v294 = vsub.s32 %v227, %v275
      %v295 = vsub.s32 %v227, %v278
      %v296 = vsub.s32 %v227, %v281
      %v297 = vsub.s32 %v227, %v284
      %v298 = vsub.s32 %v227, %v287
      %v299 = vsub.s32 %v227, %v290
      %vm300 = vcmp.eq.s32.totalorder %v255, 0
      %vm301 = vcmp.eq.s32.totalorder %v256, 0
      %vm302 = vcmp.eq.s32.totalorder %v257, 0
      %vm303 = vcmp.eq.s32.totalorder %v258, 0
      %vm304 = vcmp.eq.s32.totalorder %v259, 0
      %vm305 = vcmp.eq.s32.totalorder %v260, 0
      %vm306 = vcmp.eq.s32.totalorder %v261, 0
      %vm307 = vcmp.eq.s32.totalorder %v262, 0
      %vm308 = vcmp.eq.s32.totalorder %v263, 0
      %vm309 = vcmp.eq.s32.totalorder %v255, 1
      %vm310 = vcmp.eq.s32.totalorder %v256, 1
      %vm311 = vcmp.eq.s32.totalorder %v257, 1
      %vm312 = vcmp.eq.s32.totalorder %v258, 1
      %vm313 = vcmp.eq.s32.totalorder %v259, 1
      %vm314 = vcmp.eq.s32.totalorder %v260, 1
      %vm315 = vcmp.eq.s32.totalorder %v261, 1
      %vm316 = vcmp.eq.s32.totalorder %v262, 1
      %vm317 = vcmp.eq.s32.totalorder %v263, 1
      %319 = vset.pattern.permute.xlu0 0
      %320 = vperm.xlu0 %319, %v199
      %v321 = vpop.permute.xlu0 %320
      %324 = vset.pattern.permute.xlu0 0
      %325 = vperm.xlu0 %324, %v200
      %v326 = vpop.permute.xlu0 %325
      %329 = vset.pattern.permute.xlu0 0
      %330 = vperm.xlu0 %329, %v201
      %v331 = vpop.permute.xlu0 %330
      %334 = vset.pattern.permute.xlu0 0
      %335 = vperm.xlu0 %334, %v202
      %v336 = vpop.permute.xlu0 %335
      %339 = vset.pattern.permute.xlu0 0
      %340 = vperm.xlu0 %339, %v203
      %v341 = vpop.permute.xlu0 %340
      %344 = vset.pattern.permute.xlu0 0
      %345 = vperm.xlu0 %344, %v204
      %v346 = vpop.permute.xlu0 %345
      %349 = vset.pattern.permute.xlu0 0
      %350 = vperm.xlu0 %349, %v205
      %v351 = vpop.permute.xlu0 %350
      %354 = vset.pattern.permute.xlu0 0
      %355 = vperm.xlu0 %354, %v206
      %v356 = vpop.permute.xlu0 %355
      %359 = vset.pattern.permute.xlu0 0
      %360 = vperm.xlu0 %359, %v207
      %v361 = vpop.permute.xlu0 %360
      %v363 = vsel %vm309, %v321, 0.0
      %v364 = vsel %vm310, %v326, 0.0
      %v365 = vsel %vm311, %v331, 0.0
      %v366 = vsel %vm312, %v336, 0.0
      %v367 = vsel %vm313, %v341, 0.0
      %v368 = vsel %vm314, %v346, 0.0
      %v369 = vsel %vm315, %v351, 0.0
      %v370 = vsel %vm316, %v356, 0.0
      %v371 = vsel %vm317, %v361, 0.0
      %373 = vset.pattern.permute.xlu0 0
      %374 = vperm.xlu0 %373, %v208
      %v375 = vpop.permute.xlu0 %374
      %378 = vset.pattern.permute.xlu0 0
      %379 = vperm.xlu0 %378, %v209
      %v380 = vpop.permute.xlu0 %379
      %383 = vset.pattern.permute.xlu0 0
      %384 = vperm.xlu0 %383, %v210
      %v385 = vpop.permute.xlu0 %384
      %388 = vset.pattern.permute.xlu0 0
      %389 = vperm.xlu0 %388, %v211
      %v390 = vpop.permute.xlu0 %389
      %393 = vset.pattern.permute.xlu0 0
      %394 = vperm.xlu0 %393, %v212
      %v395 = vpop.permute.xlu0 %394
      %398 = vset.pattern.permute.xlu0 0
      %399 = vperm.xlu0 %398, %v213
      %v400 = vpop.permute.xlu0 %399
      %403 = vset.pattern.permute.xlu0 0
      %404 = vperm.xlu0 %403, %v214
      %v405 = vpop.permute.xlu0 %404
      %408 = vset.pattern.permute.xlu0 0
      %409 = vperm.xlu0 %408, %v215
      %v410 = vpop.permute.xlu0 %409
      %413 = vset.pattern.permute.xlu0 0
      %414 = vperm.xlu0 %413, %v216
      %v415 = vpop.permute.xlu0 %414
      %v417 = vsel %vm300, %v375, %v363
      %v418 = vsel %vm301, %v380, %v364
      %v419 = vsel %vm302, %v385, %v365
      %v420 = vsel %vm303, %v390, %v366
      %v421 = vsel %vm304, %v395, %v367
      %v422 = vsel %vm305, %v400, %v368
      %v423 = vsel %vm306, %v405, %v369
      %v424 = vsel %vm307, %v410, %v370
      %v425 = vsel %vm308, %v415, %v371
      %vm426 = vcmp.eq.s32.totalorder %v291, 0
      %vm427 = vcmp.eq.s32.totalorder %v292, 0
      %vm428 = vcmp.eq.s32.totalorder %v293, 0
      %vm429 = vcmp.eq.s32.totalorder %v294, 0
      %vm430 = vcmp.eq.s32.totalorder %v295, 0
      %vm431 = vcmp.eq.s32.totalorder %v296, 0
      %vm432 = vcmp.eq.s32.totalorder %v297, 0
      %vm433 = vcmp.eq.s32.totalorder %v298, 0
      %vm434 = vcmp.eq.s32.totalorder %v299, 0
      %v435 = vsel %vm426, 1, 0
      %v436 = vsel %vm427, 1, 0
      %v437 = vsel %vm428, 1, 0
      %v438 = vsel %vm429, 1, 0
      %v439 = vsel %vm430, 1, 0
      %v440 = vsel %vm431, 1, 0
      %v441 = vsel %vm432, 1, 0
      %v442 = vsel %vm433, 1, 0
      %v443 = vsel %vm434, 1, 0
      %v444 = vcvt.s32.f32 %v435
      %v445 = vcvt.s32.f32 %v436
      %v446 = vcvt.s32.f32 %v437
      %v447 = vcvt.s32.f32 %v438
      %v448 = vcvt.s32.f32 %v439
      %v449 = vcvt.s32.f32 %v440
      %v450 = vcvt.s32.f32 %v441
      %v451 = vcvt.s32.f32 %v442
      %v452 = vcvt.s32.f32 %v443
      %v453 = vpack.c.bf16 %v445, %v444
      %v454 = vpack.c.bf16 %v447, %v446
      %v455 = vpack.c.bf16 %v449, %v448
      %v456 = vpack.c.bf16 %v451, %v450
      %v457 = vpack.c.bf16 %v452, %v452
      %vm458 = vcmp.eq.s32.totalorder %v291, 1
      %vm459 = vcmp.eq.s32.totalorder %v292, 1
      %vm460 = vcmp.eq.s32.totalorder %v293, 1
      %vm461 = vcmp.eq.s32.totalorder %v294, 1
      %vm462 = vcmp.eq.s32.totalorder %v295, 1
      %vm463 = vcmp.eq.s32.totalorder %v296, 1
      %vm464 = vcmp.eq.s32.totalorder %v297, 1
      %vm465 = vcmp.eq.s32.totalorder %v298, 1
      %vm466 = vcmp.eq.s32.totalorder %v299, 1
      %v467 = vsel %vm458, 1, 0
      %v468 = vsel %vm459, 1, 0
      %v469 = vsel %vm460, 1, 0
      %v470 = vsel %vm461, 1, 0
      %v471 = vsel %vm462, 1, 0
      %v472 = vsel %vm463, 1, 0
      %v473 = vsel %vm464, 1, 0
      %v474 = vsel %vm465, 1, 0
      %v475 = vsel %vm466, 1, 0
      %v476 = vcvt.s32.f32 %v467
      %v477 = vcvt.s32.f32 %v468
      %v478 = vcvt.s32.f32 %v469
      %v479 = vcvt.s32.f32 %v470
      %v480 = vcvt.s32.f32 %v471
      %v481 = vcvt.s32.f32 %v472
      %v482 = vcvt.s32.f32 %v473
      %v483 = vcvt.s32.f32 %v474
      %v484 = vcvt.s32.f32 %v475
      %v485 = vpack.c.bf16 %v477, %v476
      %v486 = vpack.c.bf16 %v479, %v478
      %v487 = vpack.c.bf16 %v481, %v480
      %v488 = vpack.c.bf16 %v483, %v482
      %v489 = vpack.c.bf16 %v484, %v484
      %v492 = vunpack.c.l.b16 %v170
      %v493 = vunpack.c.l.b16 %v171
      %v494 = vpack.c.b16 %v493, %v492
      %vm496 = vcmask 130048
      %v498 = vsel %vm496, %v453, 0
      %v501 = vsel %vm496, %v454, 0
      %v504 = vsel %vm496, %v455, 0
      %v507 = vsel %vm496, %v456, 0
      %v510 = vsel %vm496, %v457, 0
      %512 = vmatprep.subr.bf16.mxu0 0
      %513 = vmatpush1.bf16.msra.mxu0 0
      %514 = vmatprep.subr.bf16.mxu0 0
      %515 = vmatpush1.bf16.msra.mxu0 0
      %516 = vmatprep.subr.bf16.mxu0 0
      %517 = vmatpush1.bf16.msra.mxu0 0
      %518 = vmatprep.subr.bf16.mxu0 0
      %519 = vmatpush1.bf16.msra.mxu0 0
      %520 = vmatprep.subr.bf16.mxu0 0
      %521 = vmatpush1.bf16.msra.mxu0 0
      %522 = vmatprep.subr.bf16.mxu0 0
      %523 = vmatpush1.bf16.msra.mxu0 0
      %524 = vmatprep.subr.bf16.mxu0 0
      %525 = vmatpush1.bf16.msra.mxu0 0
      %526 = vmatprep.subr.bf16.mxu0 0
      %527 = vmatpush1.bf16.msra.mxu0 %v494
      %528 = vmatprep.subr.bf16.mxu0 0
      %529 = vmatpush2.bf16.msra.mxu0 0
      %530 = vmatprep.subr.bf16.mxu0 0
      %531 = vmatpush2.bf16.msra.mxu0 0
      %532 = vmatprep.subr.bf16.mxu0 0
      %533 = vmatpush2.bf16.msra.mxu0 0
      %534 = vmatprep.subr.bf16.mxu0 0
      %535 = vmatpush2.bf16.msra.mxu0 0
      %536 = vmatprep.subr.bf16.mxu0 0
      %537 = vmatpush2.bf16.msra.mxu0 0
      %538 = vmatprep.subr.bf16.mxu0 0
      %539 = vmatpush2.bf16.msra.mxu0 0
      %540 = vmatprep.subr.bf16.mxu0 0
      %541 = vmatpush2.bf16.msra.mxu0 0
      %542 = vmatprep.subr.bf16.mxu0 0
      %543 = vmatpush2.bf16.msra.mxu0 0
      %544 = vmatprep.mubr.bf16.mxu0 0
      %545 = vmatmul.mubr.bf16.gmra.mxu0 %v498
      %v546 = vpop.f32.mrf.mxu0
      %v547 = vadd.f32 0.0, %v546
      %v548 = vpop.f32.mrf.mxu0
      %v549 = vpop.f32.mrf.mxu0
      %v550 = vadd.f32 0.0, %v549
      %v551 = vpop.f32.mrf.mxu0
      %552 = vmatprep.mubr.bf16.mxu0 0
      %553 = vmatmul.mubr.bf16.gmra.mxu0 %v501
      %v554 = vpop.f32.mrf.mxu0
      %v555 = vadd.f32 0.0, %v554
      %v556 = vpop.f32.mrf.mxu0
      %v557 = vpop.f32.mrf.mxu0
      %v558 = vadd.f32 0.0, %v557
      %v559 = vpop.f32.mrf.mxu0
      %560 = vmatprep.mubr.bf16.mxu0 0
      %561 = vmatmul.mubr.bf16.gmra.mxu0 %v504
      %v562 = vpop.f32.mrf.mxu0
      %v563 = vadd.f32 0.0, %v562
      %v564 = vpop.f32.mrf.mxu0
      %v565 = vpop.f32.mrf.mxu0
      %v566 = vadd.f32 0.0, %v565
      %v567 = vpop.f32.mrf.mxu0
      %568 = vmatprep.mubr.bf16.mxu0 0
      %569 = vmatmul.mubr.bf16.gmra.mxu0 %v507
      %v570 = vpop.f32.mrf.mxu0
      %v571 = vadd.f32 0.0, %v570
      %v572 = vpop.f32.mrf.mxu0
      %v573 = vpop.f32.mrf.mxu0
      %v574 = vadd.f32 0.0, %v573
      %v575 = vpop.f32.mrf.mxu0
      %576 = vmatprep.mubr.bf16.mxu0 0
      %577 = vmatmul.mubr.bf16.gmra.mxu0 %v510
      %v578 = vpop.f32.mrf.mxu0
      %v579 = vadd.f32 0.0, %v578
      %v580 = vpop.f32.mrf.mxu0
      %v581 = vpop.f32.mrf.mxu0
      %v582 = vpop.f32.mrf.mxu0
      %583 = vdwg.mxu0
      %v585 = vsel %vm496, %v485, 0
      %v588 = vsel %vm496, %v486, 0
      %v591 = vsel %vm496, %v487, 0
      %v594 = vsel %vm496, %v488, 0
      %v597 = vsel %vm496, %v489, 0
      %599 = vmatprep.subr.bf16.mxu0 0
      %600 = vmatpush1.bf16.msra.mxu0 0
      %601 = vmatprep.subr.bf16.mxu0 0
      %602 = vmatpush1.bf16.msra.mxu0 0
      %603 = vmatprep.subr.bf16.mxu0 0
      %604 = vmatpush1.bf16.msra.mxu0 0
      %605 = vmatprep.subr.bf16.mxu0 0
      %606 = vmatpush1.bf16.msra.mxu0 0
      %607 = vmatprep.subr.bf16.mxu0 0
      %608 = vmatpush1.bf16.msra.mxu0 0
      %609 = vmatprep.subr.bf16.mxu0 0
      %610 = vmatpush1.bf16.msra.mxu0 0
      %611 = vmatprep.subr.bf16.mxu0 0
      %612 = vmatpush1.bf16.msra.mxu0 0
      %613 = vmatprep.subr.bf16.mxu0 0
      %614 = vmatpush1.bf16.msra.mxu0 %v494
      %615 = vmatprep.subr.bf16.mxu0 0
      %616 = vmatpush2.bf16.msra.mxu0 0
      %617 = vmatprep.subr.bf16.mxu0 0
      %618 = vmatpush2.bf16.msra.mxu0 0
      %619 = vmatprep.subr.bf16.mxu0 0
      %620 = vmatpush2.bf16.msra.mxu0 0
      %621 = vmatprep.subr.bf16.mxu0 0
      %622 = vmatpush2.bf16.msra.mxu0 0
      %623 = vmatprep.subr.bf16.mxu0 0
      %624 = vmatpush2.bf16.msra.mxu0 0
      %625 = vmatprep.subr.bf16.mxu0 0
      %626 = vmatpush2.bf16.msra.mxu0 0
      %627 = vmatprep.subr.bf16.mxu0 0
      %628 = vmatpush2.bf16.msra.mxu0 0
      %629 = vmatprep.subr.bf16.mxu0 0
      %630 = vmatpush2.bf16.msra.mxu0 0
      %631 = vmatprep.mubr.bf16.mxu0 0
      %632 = vmatmul.mubr.bf16.gmra.mxu0 %v585
      %v633 = vpop.f32.mrf.mxu0
      %v634 = vadd.f32 0.0, %v633
      %v635 = vpop.f32.mrf.mxu0
      %v636 = vpop.f32.mrf.mxu0
      %v637 = vadd.f32 0.0, %v636
      %v638 = vpop.f32.mrf.mxu0
      %639 = vmatprep.mubr.bf16.mxu0 0
      %640 = vmatmul.mubr.bf16.gmra.mxu0 %v588
      %v641 = vpop.f32.mrf.mxu0
      %v642 = vadd.f32 0.0, %v641
      %v643 = vpop.f32.mrf.mxu0
      %v644 = vpop.f32.mrf.mxu0
      %v645 = vadd.f32 0.0, %v644
      %v646 = vpop.f32.mrf.mxu0
      %647 = vmatprep.mubr.bf16.mxu0 0
      %648 = vmatmul.mubr.bf16.gmra.mxu0 %v591
      %v649 = vpop.f32.mrf.mxu0
      %v650 = vadd.f32 0.0, %v649
      %v651 = vpop.f32.mrf.mxu0
      %v652 = vpop.f32.mrf.mxu0
      %v653 = vadd.f32 0.0, %v652
      %v654 = vpop.f32.mrf.mxu0
      %655 = vmatprep.mubr.bf16.mxu0 0
      %656 = vmatmul.mubr.bf16.gmra.mxu0 %v594
      %v657 = vpop.f32.mrf.mxu0
      %v658 = vadd.f32 0.0, %v657
      %v659 = vpop.f32.mrf.mxu0
      %v660 = vpop.f32.mrf.mxu0
      %v661 = vadd.f32 0.0, %v660
      %v662 = vpop.f32.mrf.mxu0
      %663 = vmatprep.mubr.bf16.mxu0 0
      %664 = vmatmul.mubr.bf16.gmra.mxu0 %v597
      %v665 = vpop.f32.mrf.mxu0
      %v666 = vadd.f32 0.0, %v665
      %v667 = vpop.f32.mrf.mxu0
      %v668 = vpop.f32.mrf.mxu0
      %v669 = vpop.f32.mrf.mxu0
      %670 = vdwg.mxu0
      %671 = vset.pattern.permute.xlu0 1
      %672 = vperm.xlu0 %671, %v208
      %v673 = vpop.permute.xlu0 %672
      %675 = vset.pattern.permute.xlu0 1
      %676 = vperm.xlu0 %675, %v209
      %v677 = vpop.permute.xlu0 %676
      %679 = vset.pattern.permute.xlu0 1
      %680 = vperm.xlu0 %679, %v210
      %v681 = vpop.permute.xlu0 %680
      %683 = vset.pattern.permute.xlu0 1
      %684 = vperm.xlu0 %683, %v211
      %v685 = vpop.permute.xlu0 %684
      %687 = vset.pattern.permute.xlu0 1
      %688 = vperm.xlu0 %687, %v212
      %v689 = vpop.permute.xlu0 %688
      %691 = vset.pattern.permute.xlu0 1
      %692 = vperm.xlu0 %691, %v213
      %v693 = vpop.permute.xlu0 %692
      %695 = vset.pattern.permute.xlu0 1
      %696 = vperm.xlu0 %695, %v214
      %v697 = vpop.permute.xlu0 %696
      %699 = vset.pattern.permute.xlu0 1
      %700 = vperm.xlu0 %699, %v215
      %v701 = vpop.permute.xlu0 %700
      %703 = vset.pattern.permute.xlu0 1
      %704 = vperm.xlu0 %703, %v216
      %v705 = vpop.permute.xlu0 %704
      %v707 = vmul.f32 %v673, %v547
      %v708 = vmul.f32 %v677, %v550
      %v709 = vmul.f32 %v681, %v555
      %v710 = vmul.f32 %v685, %v558
      %v711 = vmul.f32 %v689, %v563
      %v712 = vmul.f32 %v693, %v566
      %v713 = vmul.f32 %v697, %v571
      %v714 = vmul.f32 %v701, %v574
      %v715 = vmul.f32 %v705, %v579
      %716 = vset.pattern.permute.xlu0 1
      %717 = vperm.xlu0 %716, %v199
      %v718 = vpop.permute.xlu0 %717
      %720 = vset.pattern.permute.xlu0 1
      %721 = vperm.xlu0 %720, %v200
      %v722 = vpop.permute.xlu0 %721
      %724 = vset.pattern.permute.xlu0 1
      %725 = vperm.xlu0 %724, %v201
      %v726 = vpop.permute.xlu0 %725
      %728 = vset.pattern.permute.xlu0 1
      %729 = vperm.xlu0 %728, %v202
      %v730 = vpop.permute.xlu0 %729
      %732 = vset.pattern.permute.xlu0 1
      %733 = vperm.xlu0 %732, %v203
      %v734 = vpop.permute.xlu0 %733
      %736 = vset.pattern.permute.xlu0 1
      %737 = vperm.xlu0 %736, %v204
      %v738 = vpop.permute.xlu0 %737
      %740 = vset.pattern.permute.xlu0 1
      %741 = vperm.xlu0 %740, %v205
      %v742 = vpop.permute.xlu0 %741
      %744 = vset.pattern.permute.xlu0 1
      %745 = vperm.xlu0 %744, %v206
      %v746 = vpop.permute.xlu0 %745
      %748 = vset.pattern.permute.xlu0 1
      %749 = vperm.xlu0 %748, %v207
      %v750 = vpop.permute.xlu0 %749
      %v752 = vmul.f32 %v718, %v634
      %v753 = vmul.f32 %v722, %v637
      %v754 = vmul.f32 %v726, %v642
      %v755 = vmul.f32 %v730, %v645
      %v756 = vmul.f32 %v734, %v650
      %v757 = vmul.f32 %v738, %v653
      %v758 = vmul.f32 %v742, %v658
      %v759 = vmul.f32 %v746, %v661
      %v760 = vmul.f32 %v750, %v666
      %v761 = vadd.f32 %v707, %v752
      %v762 = vadd.f32 %v708, %v753
      %v763 = vadd.f32 %v709, %v754
      %v764 = vadd.f32 %v710, %v755
      %v765 = vadd.f32 %v711, %v756
      %v766 = vadd.f32 %v712, %v757
      %v767 = vadd.f32 %v713, %v758
      %v768 = vadd.f32 %v714, %v759
      %v769 = vadd.f32 %v715, %v760
      %v770 = vmul.f32 %v761, %v417
      %v771 = vmul.f32 %v762, %v418
      %v772 = vmul.f32 %v763, %v419
      %v773 = vmul.f32 %v764, %v420
      %v774 = vmul.f32 %v765, %v421
      %v775 = vmul.f32 %v766, %v422
      %v776 = vmul.f32 %v767, %v423
      %v777 = vmul.f32 %v768, %v424
      %v778 = vmul.f32 %v769, %v425
      %779 = vadd.xlane.f32.xlu0 %v770
      %v780 = vpop.xlane.xlu0 %779
      %781 = vadd.xlane.f32.xlu0 %v771
      %v782 = vpop.xlane.xlu0 %781
      %783 = vadd.xlane.f32.xlu0 %v772
      %v784 = vpop.xlane.xlu0 %783
      %785 = vadd.xlane.f32.xlu0 %v773
      %v786 = vpop.xlane.xlu0 %785
      %787 = vadd.xlane.f32.xlu0 %v774
      %v788 = vpop.xlane.xlu0 %787
      %789 = vadd.xlane.f32.xlu0 %v775
      %v790 = vpop.xlane.xlu0 %789
      %791 = vadd.xlane.f32.xlu0 %v776
      %v792 = vpop.xlane.xlu0 %791
      %793 = vadd.xlane.f32.xlu0 %v777
      %v794 = vpop.xlane.xlu0 %793
      %795 = vadd.xlane.f32.xlu0 %v778
      %v796 = vpop.xlane.xlu0 %795
      %v797 = vmax.f32 %v780, 0.0
      %v798 = vmax.f32 %v782, 0.0
      %v799 = vmax.f32 %v784, 0.0
      %v800 = vmax.f32 %v786, 0.0
      %v801 = vmax.f32 %v788, 0.0
      %v802 = vmax.f32 %v790, 0.0
      %v803 = vmax.f32 %v792, 0.0
      %v804 = vmax.f32 %v794, 0.0
      %v805 = vmax.f32 %v796, 0.0
      %v806 = vlog2.pop %v797
      %v807 = vmul.f32 %v806, 0.6931472
      %v808 = vlog2.pop %v798
      %v809 = vmul.f32 %v808, 0.6931472
      %v810 = vlog2.pop %v799
      %v811 = vmul.f32 %v810, 0.6931472
      %v812 = vlog2.pop %v800
      %v813 = vmul.f32 %v812, 0.6931472
      %v814 = vlog2.pop %v801
      %v815 = vmul.f32 %v814, 0.6931472
      %v816 = vlog2.pop %v802
      %v817 = vmul.f32 %v816, 0.6931472
      %v818 = vlog2.pop %v803
      %v819 = vmul.f32 %v818, 0.6931472
      %v820 = vlog2.pop %v804
      %v821 = vmul.f32 %v820, 0.6931472
      %v822 = vlog2.pop %v805
      %v823 = vmul.f32 %v822, 0.6931472
      %v824 = vsub.f32 0.0, %v807
      %v825 = vsub.f32 0.0, %v809
      %v826 = vsub.f32 0.0, %v811
      %v827 = vsub.f32 0.0, %v813
      %v828 = vsub.f32 0.0, %v815
      %v829 = vsub.f32 0.0, %v817
      %v830 = vsub.f32 0.0, %v819
      %v831 = vsub.f32 0.0, %v821
      %v832 = vsub.f32 0.0, %v823
      %v833 = vmin.f32 %v824, 100.0
      %v834 = vmin.f32 %v825, 100.0
      %v835 = vmin.f32 %v826, 100.0
      %v836 = vmin.f32 %v827, 100.0
      %v837 = vmin.f32 %v828, 100.0
      %v838 = vmin.f32 %v829, 100.0
      %v839 = vmin.f32 %v830, 100.0
      %v840 = vmin.f32 %v831, 100.0
      %v841 = vmin.f32 %v832, 100.0
      %vm842 = vcmask 7168
      %v843 = vsel %vm842, %v833, 0.0
      %v844 = vsel %vm842, %v834, 0.0
      %v845 = vadd.f32 %v843, %v844
      %v846 = vsel %vm842, %v835, 0.0
      %v847 = vadd.f32 %v845, %v846
      %v848 = vsel %vm842, %v836, 0.0
      %v849 = vadd.f32 %v847, %v848
      %v850 = vsel %vm842, %v837, 0.0
      %v851 = vadd.f32 %v849, %v850
      %v852 = vsel %vm842, %v838, 0.0
      %v853 = vadd.f32 %v851, %v852
      %v854 = vsel %vm842, %v839, 0.0
      %v855 = vadd.f32 %v853, %v854
      %v856 = vsel %vm842, %v840, 0.0
      %v857 = vadd.f32 %v855, %v856
      %v858 = vsel %vm842, %v841, 0.0
      %v859 = vadd.f32 %v857, %v858
      %860 = vadd.xlane.f32.xlu0 %v859
      %v861 = vpop.xlane.xlu0 %860
      %v862 = vrot.slane %v861, 4
      %v863 = vadd.f32 %v861, %v862
      %v864 = vrot.slane %v863, 2
      %v865 = vadd.f32 %v863, %v864
      %v866 = vrot.slane %v865, 1
      %v867 = vadd.f32 %v865, %v866
      %s868 = vtos %v867
      %v869 = vstv %s868
      %v870 = vrcp.pop 72.0
      %v871 = vmul.f32 %v869, %v870
      %v872 = vadd.f32 %v871, 0.0
      %v873 = vsel %vm842, %v797, 0.0
      %v874 = vsel %vm842, %v798, 0.0
      %v875 = vadd.f32 %v873, %v874
      %v876 = vsel %vm842, %v799, 0.0
      %v877 = vadd.f32 %v875, %v876
      %v878 = vsel %vm842, %v800, 0.0
      %v879 = vadd.f32 %v877, %v878
      %v880 = vsel %vm842, %v801, 0.0
      %v881 = vadd.f32 %v879, %v880
      %v882 = vsel %vm842, %v802, 0.0
      %v883 = vadd.f32 %v881, %v882
      %v884 = vsel %vm842, %v803, 0.0
      %v885 = vadd.f32 %v883, %v884
      %v886 = vsel %vm842, %v804, 0.0
      %v887 = vadd.f32 %v885, %v886
      %v888 = vsel %vm842, %v805, 0.0
      %v889 = vadd.f32 %v887, %v888
      %890 = vadd.xlane.f32.xlu0 %v889
      %v891 = vpop.xlane.xlu0 %890
      %v892 = vrot.slane %v891, 4
      %v893 = vadd.f32 %v891, %v892
      %v894 = vrot.slane %v893, 2
      %v895 = vadd.f32 %v893, %v894
      %v896 = vrot.slane %v895, 1
      %v897 = vadd.f32 %v895, %v896
      %s898 = vtos %v897
      %v899 = vstv %s898
      %v900 = vmul.f32 %v899, 2.0
      %v901 = vadd.f32 %v900, 1.0
      %v902 = vadd.f32 %v899, 72.0
      %v903 = vadd.f32 %v902, 1.0
      %v904 = vrcp.pop %v903
      %v905 = vmul.f32 %v901, %v904
      %v906 = vsub.f32 1.0, %v905
      %v907 = vadd.f32 %v872, %v906
      %vm908 = vcmask 0
      %909 = vst.msk [vmem:[%s159] sm:$0x1] %vm908, %v907
      %p910 = scmp.lt.s32.totalorder %s13, 1
      %s911 = scalar_select %p910, %s13, 1
      %s912 = scalar_lea.vmem %s2, %s911
      // Predicated region
      $region29: #{tpu_custom_call.1} parent=27 // pred_check
        %p913 = pneg %p83
      $region30: #{tpu_custom_call.1} parent=27 // pred_check_branch
        %915 = sbr.rel (%p913) target = $region32
      $region31: #{tpu_custom_call.1} parent=27 // pred_region
        _
      $region32: #{tpu_custom_call.1} parent=27 // pred_fallthru
        _
    $region28: #{tpu_custom_call.1} parent=5 // pred_fallthru
      _
    %p916 = scmp.le.s32.totalorder 2, %s8
    // Predicated region
    $region33: #{tpu_custom_call.1} parent=5 // pred_check
      %p917 = pneg %p916
    $region34: #{tpu_custom_call.1} parent=5 // pred_check_branch
      %919 = sbr.rel (%p917) target = $region36
    $region35: #{tpu_custom_call.1} parent=5 // pred_region
      %s920 = ssub.s32 %s8, 2
      // Predicated region
      $region37: #{tpu_custom_call.1} parent=35 // pred_check
        %p921 = pneg %p89
      $region38: #{tpu_custom_call.1} parent=35 // pred_check_branch
        %923 = sbr.rel (%p921) target = $region40
      $region39: #{tpu_custom_call.1} parent=35 // pred_region
        %p924 = scmp.lt.s32.totalorder %s14, 1
        %s925 = scalar_select %p924, %s14, 1
        %s926 = scalar_lea.vmem %s2, %s925
      $region40: #{tpu_custom_call.1} parent=35 // pred_fallthru
        _
    $region36: #{tpu_custom_call.1} parent=5 // pred_fallthru
      _
  $region6: #{tpu_custom_call.1} parent=0 // loop_footer
    %s12 = sadd.s32 1, %s8
  $region7: #{tpu_custom_call.1} parent=0 // loop_footer_branch
    %7 = sbr.rel target = $region3
  $region8: #{tpu_custom_call.1} parent=0 // loop_exit
    _

</llo_original>
